<compile_context>
chip_gen: v5e
topology: v5e:2x2
jax: 0.10.0
libtpu: 0.0.40
codegen_flags: <defaults>
</compile_context>

<pallas_src>
import functools

import jax
import jax.numpy as jnp
from jax.experimental import pallas as pl
from jax.experimental.pallas import tpu as pltpu


def _char_cnn_kernel(x_ref, w_ref, b_ref, o_ref, *, L, Co):
    # x_ref: (tn, L*D)   w_ref: (L*D, L*Co)   b_ref: (1, Co)   o_ref: (tn, Co)
    y = jnp.dot(x_ref[...], w_ref[...], preferred_element_type=jnp.float32)

    # Max over the L groups of Co output lanes (static contiguous lane slices).
    m = y[:, :Co]
    for l in range(1, L):
        m = jnp.maximum(m, y[:, l * Co:(l + 1) * Co])

    # Bias is constant along L, so it commutes with the max-pool.
    o_ref[...] = (m + b_ref[...]).astype(o_ref.dtype)


def char_cnn_encoding(inputs, weight, bias, *, tn=None):
    """inputs: (bs, T, L, D); weight: (Co, 1, K, D) [torch Conv2d]; bias: (Co,)."""
    bs, T, L, D = inputs.shape
    Co, _, K, _ = weight.shape
    pad = (K - 1) // 2
    N = bs * T
    dt = jnp.asarray(inputs).dtype

    # Banded (Toeplitz) weight: one matmul replaces K shifted matmuls.
    #   conv[n, l, c] = sum_{k,d} x[n, l+k-pad, d] * w[c, k, d]   (zero-padded)
    #   => y[n, l*Co + c] = sum_{l',d} x[n, l'*D + d] * W_band[l'*D + d, l*Co + c]
    w = jnp.asarray(weight, jnp.float32)[:, 0, :, :]          # (Co, K, D)
    W_band = jnp.zeros((L * D, L * Co), jnp.float32)
    for l in range(L):
        for k in range(K):
            lp = l + k - pad
            if 0 <= lp < L:
                W_band = W_band.at[lp * D:(lp + 1) * D,
                                   l * Co:(l + 1) * Co].set(w[:, k, :].T)
    W_band = W_band.astype(dt)
    b = jnp.asarray(bias, jnp.float32).reshape(1, Co)

    # Flatten chars into lanes: per-row layout is (L*D,) on the lane axis.
    x = jnp.asarray(inputs).reshape(N, L * D)

    # Row tile: ~0.5 MiB input blocks; keep >=2 grid steps when N allows
    # (v7x has 2 TensorCores sharding the "parallel" grid axis).
    row_bytes = L * D * x.dtype.itemsize
    if tn is None:
        tn = max(8, ((1 << 19) // row_bytes) // 8 * 8)
        half = max(8, ((N + 1) // 2 + 7) // 8 * 8)
        tn = min(tn, half)
    n_pad = pl.cdiv(N, tn) * tn
    if n_pad != N:
        x = jnp.pad(x, ((0, n_pad - N), (0, 0)))

    # TODO(synk): the optional `mask` path of CNNEncoding (mask - 999 penalty
    # before max) is not exercised by CharCNNEncoding's default call and is
    # not implemented here.

    cost = pl.CostEstimate(
        flops=2 * N * L * K * D * Co,
        transcendentals=0,
        bytes_accessed=(x.size * x.dtype.itemsize
                        + W_band.size * W_band.dtype.itemsize
                        + b.size * 4
                        + n_pad * Co * jnp.dtype(dt).itemsize),
    )

    out = pl.pallas_call(
        functools.partial(_char_cnn_kernel, L=L, Co=Co),
        out_shape=jax.ShapeDtypeStruct((n_pad, Co), dt),
        grid_spec=pltpu.PrefetchScalarGridSpec(
            num_scalar_prefetch=0,
            grid=(n_pad // tn,),
            in_specs=[
                pl.BlockSpec((tn, L * D), lambda i: (i, 0)),
                pl.BlockSpec((L * D, L * Co), lambda i: (0, 0)),
                pl.BlockSpec((1, Co), lambda i: (0, 0)),
            ],
            out_specs=pl.BlockSpec((tn, Co), lambda i: (i, 0)),
        ),
        compiler_params=pltpu.CompilerParams(
            dimension_semantics=("parallel",),
        ),
        cost_estimate=cost,
    )(x, W_band, b)

    return out[:N].reshape(bs, T, Co)


def ref_char_cnn_encoding(inputs, weight, bias):
    """Pure-JAX reference mirroring the PyTorch forward."""
    bs, T, L, D = inputs.shape
    Co, _, K, _ = weight.shape
    pad = (K - 1) // 2
    x = inputs.reshape(bs * T, L, D)
    xp = jnp.pad(x, ((0, 0), (pad, pad), (0, 0)))
    conv = jnp.zeros((bs * T, L, Co), jnp.float32)
    for k in range(K):
        conv = conv + jnp.einsum(
            "nld,cd->nlc", xp[:, k:k + L, :], weight[:, 0, k, :],
            precision=jax.lax.Precision.HIGHEST)
    conv = conv + bias[None, None, :]
    out = jnp.max(conv, axis=1)
    return out.reshape(bs, T, Co)


if __name__ == "__main__":
    # Small shapes consistent with the module:
    #   bs=2, t_maxlen=8, c_maxlen=8, input_dim=16, hidden_dim (Co)=32, K=3
    bs, t_maxlen, c_maxlen, D, Co, K = 2, 8, 8, 16, 32, 3

    key = jax.random.PRNGKey(0)
    k_in, k_w, k_b = jax.random.split(key, 3)

    inputs = jax.random.normal(k_in, (bs, t_maxlen, c_maxlen, D), jnp.float32)
    weight = jax.random.normal(k_w, (Co, 1, K, D), jnp.float32) * 0.1
    bias = jax.random.normal(k_b, (Co,), jnp.float32) * 0.1

    out = jax.block_until_ready(char_cnn_encoding(inputs, weight, bias))
    ref = ref_char_cnn_encoding(inputs, weight, bias)

    assert out.shape == (bs, t_maxlen, Co), out.shape
    err = float(jnp.max(jnp.abs(out - ref)))
    assert jnp.allclose(out, ref, atol=1e-3, rtol=1e-3), err
    print("KERNEL_OK")
</pallas_src>

<mosaic_0001>
module attributes {stable_mosaic.version = 11 : i64} {
  func.func @_char_cnn_kernel(%arg0: i32, %arg1: memref<8x128xf32, #tpu.memory_space<vmem>>, %arg2: memref<128x256xf32, #tpu.memory_space<vmem>>, %arg3: memref<1x32xf32, #tpu.memory_space<vmem>>, %arg4: memref<8x32xf32, #tpu.memory_space<vmem>>) attributes {dimension_semantics = [#tpu.dimension_semantics<parallel>], iteration_bounds = array<i64: 2>, scalar_prefetch = 0 : i64, scratch_operands = 0 : i64, tpu.core_type = #tpu.core_type<tc>, window_params = [{transform_indices = @transform_0, window_bounds = array<i64: 8, 128>}, {pipeline_mode = #tpu.pipeline_mode<synchronous>, transform_indices = @transform_1, window_bounds = array<i64: 128, 256>}, {pipeline_mode = #tpu.pipeline_mode<synchronous>, transform_indices = @transform_2, window_bounds = array<i64: 1, 32>}, {transform_indices = @transform_3, window_bounds = array<i64: 8, 32>}]} {
    %c0 = arith.constant 0 : index
    %c0_0 = arith.constant 0 : index
    %0 = vector.load %arg1[%c0, %c0_0] : memref<8x128xf32, #tpu.memory_space<vmem>>, vector<8x128xf32>
    %c0_1 = arith.constant 0 : index
    %c0_2 = arith.constant 0 : index
    %1 = vector.load %arg2[%c0_1, %c0_2] : memref<128x256xf32, #tpu.memory_space<vmem>>, vector<128x256xf32>
    %cst = arith.constant dense<0.000000e+00> : vector<8x256xf32>
    %2 = tpu.matmul %0, %1, %cst {dimension_numbers = #tpu.dot_dimension_numbers<[1], [0], [0], [1], [0, 0, 1, 1], [], []>} : vector<8x128xf32>, vector<128x256xf32>, vector<8x256xf32> -> vector<8x256xf32>
    %3 = vector.extract_strided_slice %2 {offsets = [0, 0], sizes = [8, 32], strides = [1, 1]} : vector<8x256xf32> to vector<8x32xf32>
    %4 = vector.extract_strided_slice %2 {offsets = [0, 32], sizes = [8, 32], strides = [1, 1]} : vector<8x256xf32> to vector<8x32xf32>
    %5 = arith.maximumf %3, %4 : vector<8x32xf32>
    %6 = vector.extract_strided_slice %2 {offsets = [0, 64], sizes = [8, 32], strides = [1, 1]} : vector<8x256xf32> to vector<8x32xf32>
    %7 = arith.maximumf %5, %6 : vector<8x32xf32>
    %8 = vector.extract_strided_slice %2 {offsets = [0, 96], sizes = [8, 32], strides = [1, 1]} : vector<8x256xf32> to vector<8x32xf32>
    %9 = arith.maximumf %7, %8 : vector<8x32xf32>
    %10 = vector.extract_strided_slice %2 {offsets = [0, 128], sizes = [8, 32], strides = [1, 1]} : vector<8x256xf32> to vector<8x32xf32>
    %11 = arith.maximumf %9, %10 : vector<8x32xf32>
    %12 = vector.extract_strided_slice %2 {offsets = [0, 160], sizes = [8, 32], strides = [1, 1]} : vector<8x256xf32> to vector<8x32xf32>
    %13 = arith.maximumf %11, %12 : vector<8x32xf32>
    %14 = vector.extract_strided_slice %2 {offsets = [0, 192], sizes = [8, 32], strides = [1, 1]} : vector<8x256xf32> to vector<8x32xf32>
    %15 = arith.maximumf %13, %14 : vector<8x32xf32>
    %16 = vector.extract_strided_slice %2 {offsets = [0, 224], sizes = [8, 32], strides = [1, 1]} : vector<8x256xf32> to vector<8x32xf32>
    %17 = arith.maximumf %15, %16 : vector<8x32xf32>
    %c0_3 = arith.constant 0 : index
    %c0_4 = arith.constant 0 : index
    %18 = vector.load %arg3[%c0_3, %c0_4] : memref<1x32xf32, #tpu.memory_space<vmem>>, vector<1x32xf32>
    %19 = vector.broadcast %18 : vector<1x32xf32> to vector<8x32xf32>
    %20 = arith.addf %17, %19 : vector<8x32xf32>
    %c0_5 = arith.constant 0 : index
    %c0_6 = arith.constant 0 : index
    %21 = vector.load %arg4[%c0_5, %c0_6] : memref<8x32xf32, #tpu.memory_space<vmem>>, vector<8x32xf32>
    tpu.vector_store %arg4[%c0_5, %c0_6], %20 {strides = array<i32>} : memref<8x32xf32, #tpu.memory_space<vmem>>, vector<8x32xf32>,
    return
  }
  func.func @transform_0(%arg0: i32) -> (i32, i32) {
    %c0_i32 = arith.constant 0 : i32
    %c0_i32_0 = arith.constant 0 : i32
    return %arg0, %c0_i32 : i32, i32
  }
  func.func @transform_1(%arg0: i32) -> (i32, i32) {
    %c0_i32 = arith.constant 0 : i32
    %c0_i32_0 = arith.constant 0 : i32
    %c0_i32_1 = arith.constant 0 : i32
    return %c0_i32, %c0_i32_0 : i32, i32
  }
  func.func @transform_2(%arg0: i32) -> (i32, i32) {
    %c0_i32 = arith.constant 0 : i32
    %c0_i32_0 = arith.constant 0 : i32
    %c0_i32_1 = arith.constant 0 : i32
    return %c0_i32, %c0_i32_0 : i32, i32
  }
  func.func @transform_3(%arg0: i32) -> (i32, i32) {
    %c0_i32 = arith.constant 0 : i32
    %c0_i32_0 = arith.constant 0 : i32
    return %arg0, %c0_i32 : i32, i32
  }
}

</mosaic_0001>

<llo_original>
// kernel: tpu_custom_call.1
$region0: #{tpu_custom_call.1}
  #allocation0 [shape = 'u32[]', space=smem, size = 0x4, offset = 0x4, fixed_abs, tag = 'smem constant byte address 0x4 - core index']
  #allocation1 [shape = 'u32[72,128]{1,0:T(1,128)}', space=vmem, size = 0x9000, scoped, tag = 'internal scratch']
  %s0 = inlined_call_operand.hbm [shape: f32[16,128], index: 0, kind: input, shape index: {}]
  %s1 = inlined_call_operand.hbm [shape: f32[128,256], index: 1, kind: input, shape index: {}]
  %s2 = inlined_call_operand.vmem [shape: f32[1,32], index: 2, kind: input, shape index: {}]
  %s3 = inlined_call_operand.hbm [shape: f32[16,32], index: 3, kind: output, shape index: {}]
  %s4 = sld [smem:[#allocation0]]
  $region53: #{tpu_custom_call.1} parent=0
    _
  %s6 = ssub.s32 1, %s4
  %s7 = scalar_select 0, %s6, %s4
  $region1: #{tpu_custom_call.1} parent=0
    #allocation2 [shape = 'u8[8192]{0}', space=vmem, size = 0x2000, scoped, tag = 'input window, operand 0']
    #allocation3 [shape = 's32[2]{0}', space=sflag, size = 0x8, scoped, tag = 'scoped memory for tpu_custom_call.1']
    #allocation4 [shape = 's32[2]{0}', space=sflag, size = 0x8, scoped, tag = 'scoped memory for tpu_custom_call.1']
    #allocation5 [shape = 'u8[131072]{0}', space=vmem, size = 0x20000, scoped, tag = 'input window, operand 1, single buffered']
    #allocation6 [shape = 's32[1]{0}', space=sflag, size = 0x4, scoped, tag = 'scoped memory for tpu_custom_call.1']
    #allocation7 [shape = 'u8[8192]{0}', space=vmem, size = 0x2000, scoped, tag = 'output window, operand 0']
    %8 = vsyncpa [#allocation3], 0
    %s9 = scalar_lea.sflag [#allocation3], 1
    %10 = vsyncpa %s9, 0
    %11 = vsyncpa [#allocation6], 0
    %12 = vsyncpa [#allocation4], 0
    %s13 = scalar_lea.sflag [#allocation4], 1
    %14 = vsyncpa %s13, 0
    loop: start=0, step=1, limit=4
    $region2: #{tpu_custom_call.1} parent=1 // loop_pre_header
      _
    $region3: #{tpu_custom_call.1} parent=1 // loop_header
      %s16 = sphi 0, %s20
      %p17 = scmp.ge.s32.totalorder %s16, 4
      %s26 = sphi 0, %s28
      %s29 = sphi 0, %s26
      %s30 = sphi 0, %s29
      %s46 = sphi 0, %s30
      %s50 = sphi 0, %s50
      %s52 = sphi 0, %s50
      %s53 = sphi 0, %s52
      %s67 = sphi 0, %s53
      %s71 = sphi 0, %s71
      %s73 = sphi 0, %s71
      %s74 = sphi 0, %s73
      %s88 = sphi 0, %s74
      %s94 = sphi 0, %s96
      %s97 = sphi 0, %s94
      %s98 = sphi 0, %s97
      %s114 = sphi 0, %s98
    $region4: #{tpu_custom_call.1} parent=1 // loop_header_branch
      %19 = sbr.rel (%p17) target = $region8
    $region5: #{tpu_custom_call.1} parent=1 // loop_body
      %s21 = ssub.s32 %s16, 1
      %s22 = ssub.s32 %s16, 2
      %s23 = sadd.s32 %s16, 1
      %s24 = ssub.s32 %s16, %s23
      %p25 = scmp.eq.s32.totalorder %s24, 0
      %s27 = sadd.s32 %s26, 1
      %s28 = scalar_select %p25, %s26, %s27
      %p31 = pneg %p25
      %p32 = scmp.eq.s32.totalorder %s16, 1
      %p33 = por %p31, %p32
      %p34 = scmp.ne.s32.totalorder %s26, %s29
      %p35 = scmp.eq.s32.totalorder %s16, 0
      %p36 = por %p34, %p35
      %p37 = scmp.ne.s32.totalorder %s26, %s29
      %p38 = scmp.eq.s32.totalorder %s21, 1
      %p39 = por %p37, %p38
      %p40 = scmp.ne.s32.totalorder %s29, %s30
      %p41 = scmp.eq.s32.totalorder %s21, 0
      %p42 = por %p40, %p41
      %p43 = scmp.ne.s32.totalorder %s29, %s30
      %p44 = scmp.eq.s32.totalorder %s22, 1
      %p45 = por %p43, %p44
      %p47 = scmp.ne.s32.totalorder %s30, %s46
      %p48 = scmp.eq.s32.totalorder %s22, 0
      %p49 = por %p47, %p48
      %s51 = sadd.s32 %s50, 1
      %p54 = scmp.eq.s32.totalorder %s16, 1
      %p55 = scmp.ne.s32.totalorder %s50, %s52
      %p56 = scmp.eq.s32.totalorder %s16, 0
      %p57 = por %p55, %p56
      %p58 = scmp.ne.s32.totalorder %s50, %s52
      %p59 = scmp.eq.s32.totalorder %s21, 1
      %p60 = por %p58, %p59
      %p61 = scmp.ne.s32.totalorder %s52, %s53
      %p62 = scmp.eq.s32.totalorder %s21, 0
      %p63 = por %p61, %p62
      %p64 = scmp.ne.s32.totalorder %s52, %s53
      %p65 = scmp.eq.s32.totalorder %s22, 1
      %p66 = por %p64, %p65
      %p68 = scmp.ne.s32.totalorder %s53, %s67
      %p69 = scmp.eq.s32.totalorder %s22, 0
      %p70 = por %p68, %p69
      %s72 = sadd.s32 %s71, 1
      %p75 = scmp.eq.s32.totalorder %s16, 1
      %p76 = scmp.ne.s32.totalorder %s71, %s73
      %p77 = scmp.eq.s32.totalorder %s16, 0
      %p78 = por %p76, %p77
      %p79 = scmp.ne.s32.totalorder %s71, %s73
      %p80 = scmp.eq.s32.totalorder %s21, 1
      %p81 = por %p79, %p80
      %p82 = scmp.ne.s32.totalorder %s73, %s74
      %p83 = scmp.eq.s32.totalorder %s21, 0
      %p84 = por %p82, %p83
      %p85 = scmp.ne.s32.totalorder %s73, %s74
      %p86 = scmp.eq.s32.totalorder %s22, 1
      %p87 = por %p85, %p86
      %p89 = scmp.ne.s32.totalorder %s74, %s88
      %p90 = scmp.eq.s32.totalorder %s22, 0
      %p91 = por %p89, %p90
      %s92 = ssub.s32 %s16, %s23
      %p93 = scmp.eq.s32.totalorder %s92, 0
      %s95 = sadd.s32 %s94, 1
      %s96 = scalar_select %p93, %s94, %s95
      %p99 = pneg %p93
      %p100 = scmp.eq.s32.totalorder %s16, 1
      %p101 = por %p99, %p100
      %p102 = scmp.ne.s32.totalorder %s94, %s97
      %p103 = scmp.eq.s32.totalorder %s16, 0
      %p104 = por %p102, %p103
      %p105 = scmp.ne.s32.totalorder %s94, %s97
      %p106 = scmp.eq.s32.totalorder %s21, 1
      %p107 = por %p105, %p106
      %p108 = scmp.ne.s32.totalorder %s97, %s98
      %p109 = scmp.eq.s32.totalorder %s21, 0
      %p110 = por %p108, %p109
      %p111 = scmp.ne.s32.totalorder %s97, %s98
      %p112 = scmp.eq.s32.totalorder %s22, 1
      %p113 = por %p111, %p112
      %p115 = scmp.ne.s32.totalorder %s98, %s114
      %p116 = scmp.eq.s32.totalorder %s22, 0
      %p117 = por %p115, %p116
      %p118 = scmp.le.s32.totalorder 1, %s16
      %p119 = scmp.lt.s32.totalorder %s16, 3
      %p120 = pnand %p118, %p119
      %p121 = pneg %p120
      // Predicated region
      $region9: #{tpu_custom_call.1} parent=5 // pred_check
        _
      $region10: #{tpu_custom_call.1} parent=5 // pred_check_branch
        %123 = sbr.rel (%p120) target = $region12
      $region11: #{tpu_custom_call.1} parent=5 // pred_region
        %s124 = ssub.s32 %s16, 1
        // Predicated region
        $region13: #{tpu_custom_call.1} parent=11 // pred_check
          %p125 = pneg %p63
        $region14: #{tpu_custom_call.1} parent=11 // pred_check_branch
          %127 = sbr.rel (%p125) target = $region16
        $region15: #{tpu_custom_call.1} parent=11 // pred_region
          %129 = vsyncadd [#allocation6], 0
          %s130 = sshll.u32 %s1, 4
          %s131 = int_to_ptr.hbm [resolvable:$true] %s130
          %s132 = sshll.u32 [#allocation5], 4
          %s133 = int_to_ptr.vmem [resolvable:$true] %s132
          %138 = dma.hbm_to_vmem [thread:$0]  %s131, 4096, %s133, [#allocation6], 256, 256, 16
        $region16: #{tpu_custom_call.1} parent=11 // pred_fallthru
          _
        // Predicated region
        $region17: #{tpu_custom_call.1} parent=11 // pred_check
          %p139 = pneg %p84
        $region18: #{tpu_custom_call.1} parent=11 // pred_check_branch
          %141 = sbr.rel (%p139) target = $region20
        $region19: #{tpu_custom_call.1} parent=11 // pred_region
          _
        $region20: #{tpu_custom_call.1} parent=11 // pred_fallthru
          _
      $region12: #{tpu_custom_call.1} parent=5 // pred_fallthru
        _
      %p142 = scmp.lt.s32.totalorder %s16, 2
      // Predicated region
      $region21: #{tpu_custom_call.1} parent=5 // pred_check
        %p143 = pneg %p142
      $region22: #{tpu_custom_call.1} parent=5 // pred_check_branch
        %145 = sbr.rel (%p143) target = $region24
      $region23: #{tpu_custom_call.1} parent=5 // pred_region
        // Predicated region
        $region25: #{tpu_custom_call.1} parent=23 // pred_check
          %p146 = pneg %p36
        $region26: #{tpu_custom_call.1} parent=23 // pred_check_branch
          %148 = sbr.rel (%p146) target = $region28
        $region27: #{tpu_custom_call.1} parent=23 // pred_region
          %s149 = sand.u32 %s26, 1
          %s150 = scalar_lea.sflag [#allocation3], %s149
          %s151 = sand.u32 %s26, 1
          %s152 = smul.addr %s151, 8
          %s153 = scalar_lea.vmem [#allocation2], %s152
          %155 = vsyncadd %s150, 0
          %s156 = smul.addr %s16, 8
          %s157 = scalar_lea.hbm %s0, %s156
          %s159 = sshll.u32 %s157, 4
          %s160 = int_to_ptr.hbm [resolvable:$true] %s159
          %s161 = sshll.u32 %s153, 4
          %s162 = int_to_ptr.vmem [resolvable:$true] %s161
          %164 = dma.hbm_to_vmem [thread:$0]  %s160, 128, %s162, %s150
        $region28: #{tpu_custom_call.1} parent=23 // pred_fallthru
          _
      $region24: #{tpu_custom_call.1} parent=5 // pred_fallthru
        _
      %p165 = scmp.le.s32.totalorder 1, %s16
      %p166 = scmp.lt.s32.totalorder %s16, 3
      %p167 = pnand %p165, %p166
      %p168 = pneg %p167
      // Predicated region
      $region29: #{tpu_custom_call.1} parent=5 // pred_check
        _
      $region30: #{tpu_custom_call.1} parent=5 // pred_check_branch
        %170 = sbr.rel (%p167) target = $region32
      $region31: #{tpu_custom_call.1} parent=5 // pred_region
        %s171 = ssub.s32 %s16, 1
        %s172 = sand.u32 %s29, 1
        %s173 = scalar_lea.sflag [#allocation3], %s172
        %s174 = sand.u32 %s29, 1
        %s175 = smul.addr %s174, 8
        %s176 = scalar_lea.vmem [#allocation2], %s175
        // Predicated region
        $region33: #{tpu_custom_call.1} parent=31 // pred_check
          %p177 = pneg %p42
        $region34: #{tpu_custom_call.1} parent=31 // pred_check_branch
          %179 = sbr.rel (%p177) target = $region36
        $region35: #{tpu_custom_call.1} parent=31 // pred_region
          %181 = dma.done %s173, 128
        $region36: #{tpu_custom_call.1} parent=31 // pred_fallthru
          _
        // Predicated region
        $region37: #{tpu_custom_call.1} parent=31 // pred_check
          %p182 = pneg %p63
        $region38: #{tpu_custom_call.1} parent=31 // pred_check_branch
          %184 = sbr.rel (%p182) target = $region40
        $region39: #{tpu_custom_call.1} parent=31 // pred_region
          %186 = dma.done [#allocation6], 4096
        $region40: #{tpu_custom_call.1} parent=31 // pred_fallthru
          _
        %s187 = sand.u32 %s29, 1
        %s188 = scalar_lea.sflag [#allocation3], %s187
        %s189 = sand.u32 %s29, 1
        %s190 = smul.addr %s189, 8
        %s191 = scalar_lea.vmem [#allocation2], %s190
        %p192 = pneg %p42
        %p193 = pneg %p39
        %p194 = pneg %p63
        %p195 = pneg %p60
        %p196 = pneg %p84
        %p197 = pneg %p81
        %p198 = pneg %p110
        %p199 = pneg %p107
        %s200 = sand.u32 %s97, 1
        %s201 = scalar_lea.sflag [#allocation4], %s200
        %s202 = sand.u32 %s97, 1
        %s203 = smul.addr %s202, 8
        %s204 = scalar_lea.vmem [#allocation7], %s203
        %v205 = vld [vmem:[%s176] sm:$0xff]
        %v206 = vld [vmem:[#allocation5] sm:$0xff]
        %v207 = vld [vmem:[#allocation5 + $0x8] sm:$0xff]
        %v208 = vld [vmem:[#allocation5 + $0x10] sm:$0xff]
        %v209 = vld [vmem:[#allocation5 + $0x18] sm:$0xff]
        %v210 = vld [vmem:[#allocation5 + $0x20] sm:$0xff]
        %v211 = vld [vmem:[#allocation5 + $0x28] sm:$0xff]
        %v212 = vld [vmem:[#allocation5 + $0x30] sm:$0xff]
        %v213 = vld [vmem:[#allocation5 + $0x38] sm:$0xff]
        %v214 = vld [vmem:[#allocation5 + $0x40] sm:$0xff]
        %v215 = vld [vmem:[#allocation5 + $0x48] sm:$0xff]
        %v216 = vld [vmem:[#allocation5 + $0x50] sm:$0xff]
        %v217 = vld [vmem:[#allocation5 + $0x58] sm:$0xff]
        %v218 = vld [vmem:[#allocation5 + $0x60] sm:$0xff]
        %v219 = vld [vmem:[#allocation5 + $0x68] sm:$0xff]
        %v220 = vld [vmem:[#allocation5 + $0x70] sm:$0xff]
        %v221 = vld [vmem:[#allocation5 + $0x78] sm:$0xff]
        %v222 = vld [vmem:[#allocation5 + $0x80] sm:$0xff]
        %v223 = vld [vmem:[#allocation5 + $0x88] sm:$0xff]
        %v224 = vld [vmem:[#allocation5 + $0x90] sm:$0xff]
        %v225 = vld [vmem:[#allocation5 + $0x98] sm:$0xff]
        %v226 = vld [vmem:[#allocation5 + $0xa0] sm:$0xff]
        %v227 = vld [vmem:[#allocation5 + $0xa8] sm:$0xff]
        %v228 = vld [vmem:[#allocation5 + $0xb0] sm:$0xff]
        %v229 = vld [vmem:[#allocation5 + $0xb8] sm:$0xff]
        %v230 = vld [vmem:[#allocation5 + $0xc0] sm:$0xff]
        %v231 = vld [vmem:[#allocation5 + $0xc8] sm:$0xff]
        %v232 = vld [vmem:[#allocation5 + $0xd0] sm:$0xff]
        %v233 = vld [vmem:[#allocation5 + $0xd8] sm:$0xff]
        %v234 = vld [vmem:[#allocation5 + $0xe0] sm:$0xff]
        %v235 = vld [vmem:[#allocation5 + $0xe8] sm:$0xff]
        %v236 = vld [vmem:[#allocation5 + $0xf0] sm:$0xff]
        %v237 = vld [vmem:[#allocation5 + $0xf8] sm:$0xff]
        %238 = vmatpush.msra.mxu0 %v236
        %239 = vmatpush.msra.mxu0 %v234
        %240 = vmatpush.msra.mxu0 %v232
        %241 = vmatpush.msra.mxu0 %v230
        %242 = vmatpush.msra.mxu0 %v228
        %243 = vmatpush.msra.mxu0 %v226
        %244 = vmatpush.msra.mxu0 %v224
        %245 = vmatpush.msra.mxu0 %v222
        %246 = vmatpush.msra.mxu0 %v220
        %247 = vmatpush.msra.mxu0 %v218
        %248 = vmatpush.msra.mxu0 %v216
        %249 = vmatpush.msra.mxu0 %v214
        %250 = vmatpush.msra.mxu0 %v212
        %251 = vmatpush.msra.mxu0 %v210
        %252 = vmatpush.msra.mxu0 %v208
        %253 = vmatpush.msra.mxu0 %v206
        %254 = vmatmul.f32.gmra.mxu0 %v205
        %v255 = vpop.f32.mrf.mxu0
        %v256 = vadd.f32 0.0, %v255
        %257 = vdwg.mxu0
        %258 = vmatpush.msra.mxu0 %v237
        %259 = vmatpush.msra.mxu0 %v235
        %260 = vmatpush.msra.mxu0 %v233
        %261 = vmatpush.msra.mxu0 %v231
        %262 = vmatpush.msra.mxu0 %v229
        %263 = vmatpush.msra.mxu0 %v227
        %264 = vmatpush.msra.mxu0 %v225
        %265 = vmatpush.msra.mxu0 %v223
        %266 = vmatpush.msra.mxu0 %v221
        %267 = vmatpush.msra.mxu0 %v219
        %268 = vmatpush.msra.mxu0 %v217
        %269 = vmatpush.msra.mxu0 %v215
        %270 = vmatpush.msra.mxu0 %v213
        %271 = vmatpush.msra.mxu0 %v211
        %272 = vmatpush.msra.mxu0 %v209
        %273 = vmatpush.msra.mxu0 %v207
        %274 = vmatmul.f32.gmra.mxu0 %v205
        %v275 = vpop.f32.mrf.mxu0
        %v276 = vadd.f32 0.0, %v275
        %277 = vdwg.mxu0
        %279 = vrot.lane.b32.xlu0 %v256, 96
        %v280 = vpop.permute.xlu0 %279
        %v282 = vmax.f32 %v256, %v280
        %283 = vrot.lane.b32.xlu0 %v256, 64
        %v284 = vpop.permute.xlu0 %283
        %v286 = vmax.f32 %v282, %v284
        %287 = vrot.lane.b32.xlu0 %v256, 32
        %v288 = vpop.permute.xlu0 %287
        %v290 = vmax.f32 %v286, %v288
        %v291 = vmax.f32 %v290, %v276
        %293 = vrot.lane.b32.xlu0 %v276, 96
        %v294 = vpop.permute.xlu0 %293
        %v296 = vmax.f32 %v291, %v294
        %297 = vrot.lane.b32.xlu0 %v276, 64
        %v298 = vpop.permute.xlu0 %297
        %v300 = vmax.f32 %v296, %v298
        %301 = vrot.lane.b32.xlu0 %v276, 32
        %v302 = vpop.permute.xlu0 %301
        %v304 = vmax.f32 %v300, %v302
        %v305 = vld [vmem:[%s2] sm:$0x1]
        %v307 = vperm.slane %v305, 0
        %v309 = vadd.f32 %v304, %v307
        %vm310 = vcmask 261120
        %311 = vst.msk [vmem:[%s204] sm:$0xff] %vm310, %v309
        %s312 = sand.u32 %s97, 1
        %s313 = scalar_lea.sflag [#allocation4], %s312
        %s314 = sand.u32 %s97, 1
        %s315 = smul.addr %s314, 8
        %s316 = scalar_lea.vmem [#allocation7], %s315
        // Predicated region
        $region41: #{tpu_custom_call.1} parent=31 // pred_check
          %p317 = pneg %p107
        $region42: #{tpu_custom_call.1} parent=31 // pred_check_branch
          %319 = sbr.rel (%p317) target = $region44
        $region43: #{tpu_custom_call.1} parent=31 // pred_region
          %321 = vsyncadd %s313, 0
          %s322 = smul.addr %s21, 8
          %s323 = scalar_lea.hbm %s3, %s322
          %s325 = sshll.u32 %s316, 4
          %s326 = int_to_ptr.vmem [resolvable:$true] %s325
          %s327 = sshll.u32 %s323, 4
          %s328 = int_to_ptr.hbm [resolvable:$true] %s327
          %330 = dma.vmem_to_hbm [thread:$0]  %s326, 128, %s328, %s313
        $region44: #{tpu_custom_call.1} parent=31 // pred_fallthru
          _
      $region32: #{tpu_custom_call.1} parent=5 // pred_fallthru
        _
      %p331 = scmp.le.s32.totalorder 2, %s16
      // Predicated region
      $region45: #{tpu_custom_call.1} parent=5 // pred_check
        %p332 = pneg %p331
      $region46: #{tpu_custom_call.1} parent=5 // pred_check_branch
        %334 = sbr.rel (%p332) target = $region48
      $region47: #{tpu_custom_call.1} parent=5 // pred_region
        %s335 = ssub.s32 %s16, 2
        // Predicated region
        $region49: #{tpu_custom_call.1} parent=47 // pred_check
          %p336 = pneg %p113
        $region50: #{tpu_custom_call.1} parent=47 // pred_check_branch
          %338 = sbr.rel (%p336) target = $region52
        $region51: #{tpu_custom_call.1} parent=47 // pred_region
          %s339 = sand.u32 %s98, 1
          %s340 = scalar_lea.sflag [#allocation4], %s339
          %s341 = sand.u32 %s98, 1
          %s342 = smul.addr %s341, 8
          %s343 = scalar_lea.vmem [#allocation7], %s342
          %345 = dma.done %s340, 128
        $region52: #{tpu_custom_call.1} parent=47 // pred_fallthru
          _
      $region48: #{tpu_custom_call.1} parent=5 // pred_fallthru
        _
    $region6: #{tpu_custom_call.1} parent=1 // loop_footer
      %s20 = sadd.s32 1, %s16
    $region7: #{tpu_custom_call.1} parent=1 // loop_footer_branch
      %15 = sbr.rel target = $region3
    $region8: #{tpu_custom_call.1} parent=1 // loop_exit
      _
    %346 = vsyncpa [#allocation3], 1
    %s347 = scalar_lea.sflag [#allocation3], 1
    %348 = vsyncpa %s347, 1
    %349 = vsyncpa [#allocation6], 1
    %350 = vsyncpa [#allocation4], 1
    %s351 = scalar_lea.sflag [#allocation4], 1
    %352 = vsyncpa %s351, 1

</llo_original>
